<compile_context>
chip_gen: v6e
topology: v6e:2x2x1
jax: 0.10.0
libtpu: 0.0.40
codegen_flags: <defaults>
</compile_context>

<pallas_src>
import math

import jax
import jax.numpy as jnp
from jax.experimental import pallas as pl
from jax.experimental.pallas import tpu as pltpu

HID = 40        # true hidden width
HID_PAD = 128   # lane-dense hidden width
K_PAD = 8       # fused input width (4 state + 1 action -> padded to 8)


def _noisy_net_kernel(x_ref, w1_ref, b1_ref, w2_ref, b2_ref, o_ref):
    # Fused fc1: one MXU matmul [B,8] @ [8,128] + single bias add.
    h = jnp.dot(x_ref[...], w1_ref[...],
                preferred_element_type=jnp.float32) + b1_ref[...]
    h = jnp.maximum(h, 0.0)
    # fc2 as VPU broadcast-multiply + XLU lane reduction (no [*,1] MXU result).
    # Padded hidden lanes are exactly zero in both h (zero weights+bias, relu)
    # and w2, so they contribute nothing to the sum.
    out = jnp.sum(h * w2_ref[...], axis=-1, keepdims=True) + b2_ref[...]
    o_ref[...] = out.astype(o_ref.dtype)


def init_noisy_linear(key, in_f, out_f, sigma_init=0.017):
    """Deterministic synthetic NoisyLinear params: effective W = mu + sigma*eps."""
    k1, k2, k3, k4 = jax.random.split(key, 4)
    bound = 1.0 / math.sqrt(in_f)
    w_mu = jax.random.uniform(k1, (out_f, in_f), jnp.float32, -bound, bound)
    b_mu = jax.random.uniform(k2, (out_f,), jnp.float32, -bound, bound)
    w_sigma = jnp.full((out_f, in_f), sigma_init, jnp.float32)
    b_sigma = jnp.full((out_f,), sigma_init, jnp.float32)
    w_eps = jax.random.normal(k3, (out_f, in_f), jnp.float32)
    b_eps = jax.random.normal(k4, (out_f,), jnp.float32)
    return {"w": w_mu + w_sigma * w_eps, "b": b_mu + b_sigma * b_eps}


def init_noisy_net(key):
    k1, k2, k3 = jax.random.split(key, 3)
    return {
        "fc1_s": init_noisy_linear(k1, 4, 40),
        "fc1_a": init_noisy_linear(k2, 1, 40),
        "fc2": init_noisy_linear(k3, 40, 1),
    }


def noisy_net_forward(s, a, params):
    B = s.shape[0]

    w1s = params["fc1_s"]["w"]          # [40, 4]
    b1s = params["fc1_s"]["b"]          # [40]
    w1a = params["fc1_a"]["w"]          # [40, 1]
    b1a = params["fc1_a"]["b"]          # [40]
    w2 = params["fc2"]["w"]             # [1, 40]
    b2 = params["fc2"]["b"]             # [1]

    # --- glue: fuse fc1_s/fc1_a, pad K to 8 and hidden to 128 (lane-dense) ---
    w1_cat = jnp.concatenate([w1s.T, w1a.T], axis=0)            # [5, 40]
    w1_pad = jnp.zeros((K_PAD, HID_PAD), jnp.float32)
    w1_pad = w1_pad.at[:w1_cat.shape[0], :HID].set(w1_cat)      # [8, 128]
    b1_pad = jnp.zeros((1, HID_PAD), jnp.float32)
    b1_pad = b1_pad.at[0, :HID].set(b1s + b1a)                  # [1, 128]
    w2_pad = jnp.zeros((1, HID_PAD), jnp.float32)
    w2_pad = w2_pad.at[0, :HID].set(w2[0])                      # [1, 128]
    b2_row = b2[None, :]                                        # [1, 1]

    # Fused activation [s | a | 0-pad] -> [B, 8]
    x = jnp.zeros((B, K_PAD), jnp.float32)
    x = x.at[:, :s.shape[1]].set(s).at[:, s.shape[1]:s.shape[1] + 1].set(a)

    args = (x, w1_pad, b1_pad, w2_pad, b2_row)
    vmem = pltpu.MemorySpace.VMEM

    flops = 2 * B * K_PAD * HID_PAD + 3 * B * HID_PAD  # matmul + relu/mul/reduce
    bytes_accessed = sum(int(t.size) * t.dtype.itemsize for t in args) + B * 1 * 4

    # Single-shot kernel: no grid -> no 1-step software-pipeline overhead;
    # everything lives in VMEM for the duration of the call.
    return pl.pallas_call(
        _noisy_net_kernel,
        out_shape=jax.ShapeDtypeStruct((B, 1), jnp.float32),
        in_specs=[pl.BlockSpec(memory_space=vmem) for _ in args],
        out_specs=pl.BlockSpec(memory_space=vmem),
        cost_estimate=pl.CostEstimate(
            flops=flops, transcendentals=0, bytes_accessed=bytes_accessed),
    )(*args)
    # TODO(synk): for RL-loop throughput, batch many (s, a) pairs per call and
    # add a "parallel" batch grid axis (engages v7x's second TensorCore).


def noisy_net_reference(s, a, params):
    h = s @ params["fc1_s"]["w"].T + params["fc1_s"]["b"]
    h = h + a @ params["fc1_a"]["w"].T + params["fc1_a"]["b"]
    h = jnp.maximum(h, 0.0)
    return h @ params["fc2"]["w"].T + params["fc2"]["b"]


if __name__ == "__main__":
    key = jax.random.PRNGKey(0)
    k_params, k_s, k_a = jax.random.split(key, 3)

    params = init_noisy_net(k_params)

    B = 8
    s = jax.random.normal(k_s, (B, 4), jnp.float32)   # state input (in=4)
    a = jax.random.normal(k_a, (B, 1), jnp.float32)   # action input (in=1)

    out = noisy_net_forward(s, a, params)
    out = jax.block_until_ready(out)

    ref = noisy_net_reference(s, a, params)
    assert out.shape == (B, 1)
    assert jnp.allclose(out, ref, atol=1e-5, rtol=1e-5), "mismatch vs reference"

    print("KERNEL_OK")
</pallas_src>

<mosaic_0001>
module attributes {stable_mosaic.version = 11 : i64} {
  func.func @_noisy_net_kernel(%arg0: memref<8x8xf32, #tpu.memory_space<vmem>>, %arg1: memref<8x128xf32, #tpu.memory_space<vmem>>, %arg2: memref<1x128xf32, #tpu.memory_space<vmem>>, %arg3: memref<1x128xf32, #tpu.memory_space<vmem>>, %arg4: memref<1x1xf32, #tpu.memory_space<vmem>>, %arg5: memref<8x1xf32, #tpu.memory_space<vmem>>) attributes {dimension_semantics = [], scalar_prefetch = 0 : i64, scratch_operands = 0 : i64, tpu.core_type = #tpu.core_type<tc>} {
    %c0 = arith.constant 0 : index
    %c0_0 = arith.constant 0 : index
    %0 = vector.load %arg0[%c0, %c0_0] : memref<8x8xf32, #tpu.memory_space<vmem>>, vector<8x8xf32>
    %c0_1 = arith.constant 0 : index
    %c0_2 = arith.constant 0 : index
    %1 = vector.load %arg1[%c0_1, %c0_2] : memref<8x128xf32, #tpu.memory_space<vmem>>, vector<8x128xf32>
    %cst = arith.constant dense<0.000000e+00> : vector<8x128xf32>
    %2 = tpu.matmul %0, %1, %cst {dimension_numbers = #tpu.dot_dimension_numbers<[1], [0], [0], [1], [0, 0, 1, 1], [], []>} : vector<8x8xf32>, vector<8x128xf32>, vector<8x128xf32> -> vector<8x128xf32>
    %c0_3 = arith.constant 0 : index
    %c0_4 = arith.constant 0 : index
    %3 = vector.load %arg2[%c0_3, %c0_4] : memref<1x128xf32, #tpu.memory_space<vmem>>, vector<1x128xf32>
    %4 = vector.broadcast %3 : vector<1x128xf32> to vector<8x128xf32>
    %5 = arith.addf %2, %4 : vector<8x128xf32>
    %cst_5 = arith.constant 0.000000e+00 : f32
    %6 = vector.broadcast %cst_5 : f32 to vector<8x128xf32>
    %7 = arith.maximumf %5, %6 : vector<8x128xf32>
    %c0_6 = arith.constant 0 : index
    %c0_7 = arith.constant 0 : index
    %8 = vector.load %arg3[%c0_6, %c0_7] : memref<1x128xf32, #tpu.memory_space<vmem>>, vector<1x128xf32>
    %9 = vector.broadcast %8 : vector<1x128xf32> to vector<8x128xf32>
    %10 = arith.mulf %7, %9 : vector<8x128xf32>
    %cst_8 = arith.constant dense<0.000000e+00> : vector<8xf32>
    %11 = vector.multi_reduction <add>, %10, %cst_8 [1] : vector<8x128xf32> to vector<8xf32>
    %12 = vector.shape_cast %11 : vector<8xf32> to vector<8x1xf32>
    %c0_9 = arith.constant 0 : index
    %c0_10 = arith.constant 0 : index
    %13 = vector.load %arg4[%c0_9, %c0_10] : memref<1x1xf32, #tpu.memory_space<vmem>>, vector<1x1xf32>
    %14 = vector.broadcast %13 : vector<1x1xf32> to vector<8x1xf32>
    %15 = arith.addf %12, %14 : vector<8x1xf32>
    %c0_11 = arith.constant 0 : index
    %c0_12 = arith.constant 0 : index
    %16 = vector.load %arg5[%c0_11, %c0_12] : memref<8x1xf32, #tpu.memory_space<vmem>>, vector<8x1xf32>
    tpu.vector_store %arg5[%c0_11, %c0_12], %15 {strides = array<i32>} : memref<8x1xf32, #tpu.memory_space<vmem>>, vector<8x1xf32>,
    return
  }
}

</mosaic_0001>

<llo_original>
// kernel: tpu_custom_call.1
$region0: #{tpu_custom_call.1}
  #allocation0 [shape = 'u32[]', space=smem, size = 0x4, offset = 0x4, fixed_abs, tag = 'smem constant byte address 0x4 - core index']
  #allocation1 [shape = 'u32[144,128]{1,0:T(1,128)}', space=vmem, size = 0x12000, scoped, tag = 'internal scratch']
  #allocation2 [shape = 'f32[1,1]{1,0:T(1,128)S(1)}', space=vmem, size = 0x200, scoped, tag = 'scoped memory for tpu_custom_call.1']
  %s0 = inlined_call_operand.hbm [shape: f32[8,8], index: 0, kind: input, shape index: {}]
  %s1 = inlined_call_operand.hbm [shape: f32[8,128], index: 1, kind: input, shape index: {}]
  %s2 = inlined_call_operand.vmem [shape: f32[1,128], index: 2, kind: input, shape index: {}]
  %s3 = inlined_call_operand.vmem [shape: f32[1,128], index: 3, kind: input, shape index: {}]
  %s4 = inlined_call_operand.<no memory space> [shape: f32[1,1], index: 4, kind: input, shape index: {}]
  %s5 = inlined_call_operand.vmem [shape: f32[8,1], index: 5, kind: output, shape index: {}]
  %s6 = sld [smem:[#allocation0]]
  $region38: #{tpu_custom_call.1} parent=0
    _
  %s8 = ssub.s32 1, %s6
  %s9 = scalar_select 0, %s8, %s6
  %v10 = vstv %s4
  %11 = vst [vmem:[#allocation2] sm:$0x1] %v10
  $region1: #{tpu_custom_call.1} parent=0
    #allocation3 [shape = 'u8[4096]{0}', space=vmem, size = 0x1000, scoped, tag = 'input window, operand 0, single buffered']
    #allocation4 [shape = 's32[1]{0}', space=sflag, size = 0x4, scoped, tag = 'scoped memory for tpu_custom_call.1']
    #allocation5 [shape = 'u8[4096]{0}', space=vmem, size = 0x1000, scoped, tag = 'input window, operand 1, single buffered']
    #allocation6 [shape = 's32[1]{0}', space=sflag, size = 0x4, scoped, tag = 'scoped memory for tpu_custom_call.1']
    %12 = vsyncpa [#allocation4], 0
    %13 = vsyncpa [#allocation6], 0
    // Predicated region
    $region2: #{tpu_custom_call.1} parent=1 // pred_check
      _
    $region3: #{tpu_custom_call.1} parent=1 // pred_check_branch
      %15 = sbr.rel (0) target = $region5
    $region4: #{tpu_custom_call.1} parent=1 // pred_region
      %s17 = ssub.s32 128, 128
      %18 = vsyncadd [#allocation4], %s17
      %s20 = sshll.u32 [#allocation3], 4
      %s21 = int_to_ptr.vmem [resolvable:$true] %s20
      %23 = dma.hbm_to_vmem [thread:$0]  %s0, 128, %s21, [#allocation4]
    $region5: #{tpu_custom_call.1} parent=1 // pred_fallthru
      _
    // Predicated region
    $region6: #{tpu_custom_call.1} parent=1 // pred_check
      _
    $region7: #{tpu_custom_call.1} parent=1 // pred_check_branch
      %25 = sbr.rel (0) target = $region9
    $region8: #{tpu_custom_call.1} parent=1 // pred_region
      %s27 = ssub.s32 128, 128
      %28 = vsyncadd [#allocation6], %s27
      %s30 = sshll.u32 [#allocation5], 4
      %s31 = int_to_ptr.vmem [resolvable:$true] %s30
      %33 = dma.hbm_to_vmem [thread:$0]  %s1, 128, %s31, [#allocation6]
    $region9: #{tpu_custom_call.1} parent=1 // pred_fallthru
      _
    // Predicated region
    $region10: #{tpu_custom_call.1} parent=1 // pred_check
      _
    $region11: #{tpu_custom_call.1} parent=1 // pred_check_branch
      %35 = sbr.rel (0) target = $region13
    $region12: #{tpu_custom_call.1} parent=1 // pred_region
      _
    $region13: #{tpu_custom_call.1} parent=1 // pred_fallthru
      _
    // Predicated region
    $region14: #{tpu_custom_call.1} parent=1 // pred_check
      _
    $region15: #{tpu_custom_call.1} parent=1 // pred_check_branch
      %37 = sbr.rel (0) target = $region17
    $region16: #{tpu_custom_call.1} parent=1 // pred_region
      _
    $region17: #{tpu_custom_call.1} parent=1 // pred_fallthru
      _
    // Predicated region
    $region18: #{tpu_custom_call.1} parent=1 // pred_check
      _
    $region19: #{tpu_custom_call.1} parent=1 // pred_check_branch
      %39 = sbr.rel (0) target = $region21
    $region20: #{tpu_custom_call.1} parent=1 // pred_region
      _
    $region21: #{tpu_custom_call.1} parent=1 // pred_fallthru
      _
    // Predicated region
    $region22: #{tpu_custom_call.1} parent=1 // pred_check
      _
    $region23: #{tpu_custom_call.1} parent=1 // pred_check_branch
      %41 = sbr.rel (0) target = $region25
    $region24: #{tpu_custom_call.1} parent=1 // pred_region
      %42 = dma.done [#allocation4], 128
    $region25: #{tpu_custom_call.1} parent=1 // pred_fallthru
      _
    // Predicated region
    $region26: #{tpu_custom_call.1} parent=1 // pred_check
      _
    $region27: #{tpu_custom_call.1} parent=1 // pred_check_branch
      %44 = sbr.rel (0) target = $region29
    $region28: #{tpu_custom_call.1} parent=1 // pred_region
      %45 = dma.done [#allocation6], 128
    $region29: #{tpu_custom_call.1} parent=1 // pred_fallthru
      _
    %v46 = vld [vmem:[#allocation3] sm:$0xff]
    %v47 = vld [vmem:[#allocation5] sm:$0xff]
    %v48 = vld [vmem:[%s2] sm:$0x1]
    %v50 = vlaneseq
    %v51 = vshrl.u32 %v50, 7
    %v52 = vsub.s32 0, %v51
    %v53 = vrot.slane %v48, %v52
    %vm55 = vcmask 64512
    %v57 = vsel %vm55, %v46, 0
    %59 = vmatprep.subr.mxu0 0.0
    %60 = vmatpush1.msra.mxu0 0.0
    %61 = vmatprep.subr.mxu0 0.0
    %62 = vmatpush1.msra.mxu0 0.0
    %63 = vmatprep.subr.mxu0 0.0
    %64 = vmatpush1.msra.mxu0 0.0
    %65 = vmatprep.subr.mxu0 0.0
    %66 = vmatpush1.msra.mxu0 0.0
    %67 = vmatprep.subr.mxu0 0.0
    %68 = vmatpush1.msra.mxu0 0.0
    %69 = vmatprep.subr.mxu0 0.0
    %70 = vmatpush1.msra.mxu0 0.0
    %71 = vmatprep.subr.mxu0 0.0
    %72 = vmatpush1.msra.mxu0 0.0
    %73 = vmatprep.subr.mxu0 0.0
    %74 = vmatpush1.msra.mxu0 0.0
    %75 = vmatprep.subr.mxu0 0.0
    %76 = vmatpush1.msra.mxu0 0.0
    %77 = vmatprep.subr.mxu0 0.0
    %78 = vmatpush1.msra.mxu0 0.0
    %79 = vmatprep.subr.mxu0 0.0
    %80 = vmatpush1.msra.mxu0 0.0
    %81 = vmatprep.subr.mxu0 0.0
    %82 = vmatpush1.msra.mxu0 0.0
    %83 = vmatprep.subr.mxu0 0.0
    %84 = vmatpush1.msra.mxu0 0.0
    %85 = vmatprep.subr.mxu0 0.0
    %86 = vmatpush1.msra.mxu0 0.0
    %87 = vmatprep.subr.mxu0 0.0
    %88 = vmatpush1.msra.mxu0 0.0
    %89 = vmatprep.subr.mxu0 0.0
    %90 = vmatpush1.msra.mxu0 %v47
    %91 = vmatprep.subr.mxu0 0.0
    %92 = vmatpush2.msra.mxu0 0.0
    %93 = vmatprep.subr.mxu0 0.0
    %94 = vmatpush2.msra.mxu0 0.0
    %95 = vmatprep.subr.mxu0 0.0
    %96 = vmatpush2.msra.mxu0 0.0
    %97 = vmatprep.subr.mxu0 0.0
    %98 = vmatpush2.msra.mxu0 0.0
    %99 = vmatprep.subr.mxu0 0.0
    %100 = vmatpush2.msra.mxu0 0.0
    %101 = vmatprep.subr.mxu0 0.0
    %102 = vmatpush2.msra.mxu0 0.0
    %103 = vmatprep.subr.mxu0 0.0
    %104 = vmatpush2.msra.mxu0 0.0
    %105 = vmatprep.subr.mxu0 0.0
    %106 = vmatpush2.msra.mxu0 0.0
    %107 = vmatprep.subr.mxu0 0.0
    %108 = vmatpush2.msra.mxu0 0.0
    %109 = vmatprep.subr.mxu0 0.0
    %110 = vmatpush2.msra.mxu0 0.0
    %111 = vmatprep.subr.mxu0 0.0
    %112 = vmatpush2.msra.mxu0 0.0
    %113 = vmatprep.subr.mxu0 0.0
    %114 = vmatpush2.msra.mxu0 0.0
    %115 = vmatprep.subr.mxu0 0.0
    %116 = vmatpush2.msra.mxu0 0.0
    %117 = vmatprep.subr.mxu0 0.0
    %118 = vmatpush2.msra.mxu0 0.0
    %119 = vmatprep.subr.mxu0 0.0
    %120 = vmatpush2.msra.mxu0 0.0
    %121 = vmatprep.subr.mxu0 0.0
    %122 = vmatpush2.msra.mxu0 0.0
    %123 = vmatprep.mubr.f32.mxu0 0.0
    %124 = vmatmul.mubr.f32.gmra.mxu0 %v57
    %v125 = vpop.f32.mrf.mxu0
    %v126 = vadd.f32 %v53, %v125
    %v127 = vpop.f32.mrf.mxu0
    %128 = vdwg.mxu0
    %v129 = vmax.f32 %v126, 0.0
    %v130 = vld [vmem:[%s3] sm:$0x1]
    %v132 = vlaneseq
    %v133 = vshrl.u32 %v132, 7
    %v134 = vsub.s32 0, %v133
    %v135 = vrot.slane %v130, %v134
    %v137 = vmul.f32 %v129, %v135
    %138 = vadd.xlane.f32.xlu0 %v137
    %v139 = vpop.xlane.xlu0 %138
    %v140 = vld [vmem:[#allocation2] sm:$0x1]
    %v142 = vlaneseq
    %v143 = vshrl.u32 %v142, 7
    %v144 = vsub.s32 0, %v143
    %v145 = vrot.slane %v140, %v144
    %v147 = vadd.f32 %v139, %v145
    %vm148 = vcmask 7168
    %149 = vst.msk [vmem:[%s5] sm:$0xff] %vm148, %v147
    // Predicated region
    $region30: #{tpu_custom_call.1} parent=1 // pred_check
      _
    $region31: #{tpu_custom_call.1} parent=1 // pred_check_branch
      %151 = sbr.rel (0) target = $region33
    $region32: #{tpu_custom_call.1} parent=1 // pred_region
      _
    $region33: #{tpu_custom_call.1} parent=1 // pred_fallthru
      _
    // Predicated region
    $region34: #{tpu_custom_call.1} parent=1 // pred_check
      _
    $region35: #{tpu_custom_call.1} parent=1 // pred_check_branch
      %153 = sbr.rel (0) target = $region37
    $region36: #{tpu_custom_call.1} parent=1 // pred_region
      _
    $region37: #{tpu_custom_call.1} parent=1 // pred_fallthru
      _
    %154 = vsyncpa [#allocation4], 1
    %155 = vsyncpa [#allocation6], 1

</llo_original>
